<compile_context>
chip_gen: v5e
topology: v5e:2x2
jax: 0.10.0
libtpu: 0.0.40
codegen_flags: <defaults>
</compile_context>

<pallas_src>
import math

import jax
import jax.numpy as jnp
from jax import lax
from jax.experimental import pallas as pl
from jax.experimental.pallas import tpu as pltpu

# ---- model hyperparameters (small shapes consistent with the module) ----
DIM = 32
NUM_HEAD = 4
HEAD_DIM = DIM // NUM_HEAD
SCALE = HEAD_DIM ** (-0.5)
TAU = 2.0          # MultiStepLIFNode(tau=2.0)
V_TH = 1.0         # spikingjelly default v_threshold
V_RESET = 0.0      # spikingjelly default v_reset (hard reset)
B = 2
N = 8


# --------------------------- fully fused kernel ---------------------------
def _fused_kernel(x_ref, wqkv_ref, wproj_ref, bproj_ref, o_ref):
    C, H, D = DIM, NUM_HEAD, HEAD_DIM

    # 1) qkv linear (qkv_bias=False): one (B*N, C) @ (C, 3C) MXU pass.
    x = x_ref[...].astype(jnp.float32)                                    # (B*N, C)
    qkv = jnp.dot(x, wqkv_ref[...], preferred_element_type=jnp.float32)   # (B*N, 3C)

    # 2) MultiStepLIFNode over the leading (time = batch) axis, statically unrolled
    #    (decay_input=True, hard reset, v_reset=0). Membrane stays in vregs.
    v = jnp.zeros((N, 3 * C), jnp.float32)
    spikes = []
    for t in range(B):                                    # T = B = 2, static unroll
        xt = qkv[t * N:(t + 1) * N, :]
        # neuronal_charge: v = v + (x - (v - v_reset)) / tau
        v = v + (xt - (v - V_RESET)) / TAU
        # neuronal_fire: heaviside(v - v_threshold)
        spk = (v >= V_TH).astype(jnp.float32)
        # neuronal_reset (hard): v = (1 - spike) * v + spike * v_reset
        v = v * (1.0 - spk) + V_RESET * spk
        spikes.append(spk)                                # (N, 3C) each

    # 3) per-(batch, head) attention via static lane slices (no XLA transposes):
    #    reshape(B,N,3,H,D).permute(2,0,3,1,4) is equivalent to
    #    q = spikes[:, 0:C], k = spikes[:, C:2C], v = spikes[:, 2C:3C],
    #    with head h at lanes [h*D:(h+1)*D] of each third.
    batch_outs = []
    for t in range(B):
        s = spikes[t]                                     # (N, 3C)
        head_outs = []
        for h in range(H):
            qh = s[:, h * D:(h + 1) * D]                  # (N, D)
            kh = s[:, C + h * D:C + (h + 1) * D]          # (N, D)
            vh = s[:, 2 * C + h * D:2 * C + (h + 1) * D]  # (N, D)
            # q @ k^T without materializing a transpose
            scores = lax.dot_general(
                qh, kh, (((1,), (1,)), ((), ())),
                preferred_element_type=jnp.float32) * SCALE               # (N, N)
            scores = scores - jnp.max(scores, axis=-1, keepdims=True)
            e = jnp.exp(scores)
            p = e / jnp.sum(e, axis=-1, keepdims=True)    # softmax; dropout = identity
            head_outs.append(
                jnp.dot(p, vh, preferred_element_type=jnp.float32))       # (N, D)
        # heads concatenated along lanes -> lane-dense (N, C) per batch
        batch_outs.append(jnp.concatenate(head_outs, axis=-1))
    o_all = jnp.concatenate(batch_outs, axis=0)           # (B*N, C)

    # 4) proj linear (bias=True); final dropout = identity. One lane-dense store.
    out = jnp.dot(o_all, wproj_ref[...], preferred_element_type=jnp.float32)
    out = out + bproj_ref[...]
    o_ref[...] = out.astype(o_ref.dtype)


# ------------------------------ full forward ------------------------------
def spike_self_attention(x, params):
    Bb, Nn, C = x.shape
    x2d = x.reshape(Bb * Nn, C)  # pure row-major reshape, no transpose / layout churn

    vmem = pl.BlockSpec(memory_space=pltpu.MemorySpace.VMEM)
    out2d = pl.pallas_call(
        _fused_kernel,
        out_shape=jax.ShapeDtypeStruct((Bb * Nn, C), x.dtype),
        in_specs=[vmem, vmem, vmem, vmem],
        out_specs=vmem,
    )(x2d, params["w_qkv"], params["w_proj"], params["b_proj"])

    return out2d.reshape(Bb, Nn, C)


if __name__ == "__main__":
    key = jax.random.PRNGKey(0)
    k1, k2, k3, kx = jax.random.split(key, 4)

    # Deterministic synthetic parameters. Torch Linear weight is (out, in);
    # here weights are stored pre-transposed as (in, out).
    params = {
        "w_qkv": jax.random.normal(k1, (DIM, 3 * DIM), jnp.float32) / math.sqrt(DIM),
        "w_proj": jax.random.normal(k2, (DIM, DIM), jnp.float32) / math.sqrt(DIM),
        "b_proj": jax.random.normal(k3, (1, DIM), jnp.float32) * 0.02,
    }

    x = jax.random.normal(kx, (B, N, DIM), jnp.float32)

    out = jax.jit(spike_self_attention)(x, params)
    out = jax.block_until_ready(out)

    assert out.shape == (B, N, DIM)
    assert bool(jnp.all(jnp.isfinite(out)))
    print("KERNEL_OK")
</pallas_src>

<mosaic_0001>
module attributes {stable_mosaic.version = 11 : i64} {
  func.func @_fused_kernel(%arg0: memref<16x32xf32, #tpu.memory_space<vmem>>, %arg1: memref<32x96xf32, #tpu.memory_space<vmem>>, %arg2: memref<32x32xf32, #tpu.memory_space<vmem>>, %arg3: memref<1x32xf32, #tpu.memory_space<vmem>>, %arg4: memref<16x32xf32, #tpu.memory_space<vmem>>) attributes {dimension_semantics = [], scalar_prefetch = 0 : i64, scratch_operands = 0 : i64, tpu.core_type = #tpu.core_type<tc>} {
    %c0 = arith.constant 0 : index
    %c0_0 = arith.constant 0 : index
    %0 = vector.load %arg0[%c0, %c0_0] : memref<16x32xf32, #tpu.memory_space<vmem>>, vector<16x32xf32>
    %c0_1 = arith.constant 0 : index
    %c0_2 = arith.constant 0 : index
    %1 = vector.load %arg1[%c0_1, %c0_2] : memref<32x96xf32, #tpu.memory_space<vmem>>, vector<32x96xf32>
    %cst = arith.constant dense<0.000000e+00> : vector<16x96xf32>
    %2 = tpu.matmul %0, %1, %cst {dimension_numbers = #tpu.dot_dimension_numbers<[1], [0], [0], [1], [0, 0, 1, 1], [], []>} : vector<16x32xf32>, vector<32x96xf32>, vector<16x96xf32> -> vector<16x96xf32>
    %cst_3 = arith.constant 0.000000e+00 : f32
    %3 = vector.broadcast %cst_3 : f32 to vector<8x96xf32>
    %4 = vector.extract_strided_slice %2 {offsets = [0, 0], sizes = [8, 96], strides = [1, 1]} : vector<16x96xf32> to vector<8x96xf32>
    %cst_4 = arith.constant 0.000000e+00 : f32
    %5 = vector.broadcast %cst_4 : f32 to vector<8x96xf32>
    %6 = arith.subf %3, %5 : vector<8x96xf32>
    %7 = arith.subf %4, %6 : vector<8x96xf32>
    %cst_5 = arith.constant 2.000000e+00 : f32
    %8 = vector.broadcast %cst_5 : f32 to vector<8x96xf32>
    %9 = arith.divf %7, %8 : vector<8x96xf32>
    %10 = arith.addf %3, %9 : vector<8x96xf32>
    %cst_6 = arith.constant 1.000000e+00 : f32
    %11 = vector.broadcast %cst_6 : f32 to vector<8x96xf32>
    %12 = arith.cmpf oge, %10, %11 : vector<8x96xf32>
    %13 = arith.extui %12 : vector<8x96xi1> to vector<8x96xi32>
    %14 = arith.sitofp %13 : vector<8x96xi32> to vector<8x96xf32>
    %cst_7 = arith.constant 1.000000e+00 : f32
    %15 = vector.broadcast %cst_7 : f32 to vector<8x96xf32>
    %16 = arith.subf %15, %14 : vector<8x96xf32>
    %17 = arith.mulf %10, %16 : vector<8x96xf32>
    %cst_8 = arith.constant 0.000000e+00 : f32
    %18 = vector.broadcast %cst_8 : f32 to vector<8x96xf32>
    %19 = arith.mulf %18, %14 : vector<8x96xf32>
    %20 = arith.addf %17, %19 : vector<8x96xf32>
    %21 = vector.extract_strided_slice %2 {offsets = [8, 0], sizes = [8, 96], strides = [1, 1]} : vector<16x96xf32> to vector<8x96xf32>
    %cst_9 = arith.constant 0.000000e+00 : f32
    %22 = vector.broadcast %cst_9 : f32 to vector<8x96xf32>
    %23 = arith.subf %20, %22 : vector<8x96xf32>
    %24 = arith.subf %21, %23 : vector<8x96xf32>
    %cst_10 = arith.constant 2.000000e+00 : f32
    %25 = vector.broadcast %cst_10 : f32 to vector<8x96xf32>
    %26 = arith.divf %24, %25 : vector<8x96xf32>
    %27 = arith.addf %20, %26 : vector<8x96xf32>
    %cst_11 = arith.constant 1.000000e+00 : f32
    %28 = vector.broadcast %cst_11 : f32 to vector<8x96xf32>
    %29 = arith.cmpf oge, %27, %28 : vector<8x96xf32>
    %30 = arith.extui %29 : vector<8x96xi1> to vector<8x96xi32>
    %31 = arith.sitofp %30 : vector<8x96xi32> to vector<8x96xf32>
    %32 = vector.extract_strided_slice %14 {offsets = [0, 0], sizes = [8, 8], strides = [1, 1]} : vector<8x96xf32> to vector<8x8xf32>
    %33 = vector.extract_strided_slice %14 {offsets = [0, 32], sizes = [8, 8], strides = [1, 1]} : vector<8x96xf32> to vector<8x8xf32>
    %34 = vector.extract_strided_slice %14 {offsets = [0, 64], sizes = [8, 8], strides = [1, 1]} : vector<8x96xf32> to vector<8x8xf32>
    %cst_12 = arith.constant dense<0.000000e+00> : vector<8x8xf32>
    %35 = tpu.matmul %32, %33, %cst_12 {dimension_numbers = #tpu.dot_dimension_numbers<[1], [1], [0], [0], [0, 0, 1, 0], [], []>} : vector<8x8xf32>, vector<8x8xf32>, vector<8x8xf32> -> vector<8x8xf32>
    %cst_13 = arith.constant 0.353553385 : f32
    %36 = vector.broadcast %cst_13 : f32 to vector<8x8xf32>
    %37 = arith.mulf %35, %36 : vector<8x8xf32>
    %cst_14 = arith.constant dense<0xFF800000> : vector<8xf32>
    %38 = vector.multi_reduction <maximumf>, %37, %cst_14 [1] : vector<8x8xf32> to vector<8xf32>
    %39 = vector.shape_cast %38 : vector<8xf32> to vector<8x1xf32>
    %40 = vector.broadcast %39 : vector<8x1xf32> to vector<8x8xf32>
    %41 = arith.subf %37, %40 : vector<8x8xf32>
    %42 = math.exp %41 : vector<8x8xf32>
    %cst_15 = arith.constant dense<0.000000e+00> : vector<8xf32>
    %43 = vector.multi_reduction <add>, %42, %cst_15 [1] : vector<8x8xf32> to vector<8xf32>
    %44 = vector.shape_cast %43 : vector<8xf32> to vector<8x1xf32>
    %45 = vector.broadcast %44 : vector<8x1xf32> to vector<8x8xf32>
    %46 = arith.divf %42, %45 : vector<8x8xf32>
    %cst_16 = arith.constant dense<0.000000e+00> : vector<8x8xf32>
    %47 = tpu.matmul %46, %34, %cst_16 {dimension_numbers = #tpu.dot_dimension_numbers<[1], [0], [0], [1], [0, 0, 1, 1], [], []>} : vector<8x8xf32>, vector<8x8xf32>, vector<8x8xf32> -> vector<8x8xf32>
    %48 = vector.extract_strided_slice %14 {offsets = [0, 8], sizes = [8, 8], strides = [1, 1]} : vector<8x96xf32> to vector<8x8xf32>
    %49 = vector.extract_strided_slice %14 {offsets = [0, 40], sizes = [8, 8], strides = [1, 1]} : vector<8x96xf32> to vector<8x8xf32>
    %50 = vector.extract_strided_slice %14 {offsets = [0, 72], sizes = [8, 8], strides = [1, 1]} : vector<8x96xf32> to vector<8x8xf32>
    %cst_17 = arith.constant dense<0.000000e+00> : vector<8x8xf32>
    %51 = tpu.matmul %48, %49, %cst_17 {dimension_numbers = #tpu.dot_dimension_numbers<[1], [1], [0], [0], [0, 0, 1, 0], [], []>} : vector<8x8xf32>, vector<8x8xf32>, vector<8x8xf32> -> vector<8x8xf32>
    %cst_18 = arith.constant 0.353553385 : f32
    %52 = vector.broadcast %cst_18 : f32 to vector<8x8xf32>
    %53 = arith.mulf %51, %52 : vector<8x8xf32>
    %cst_19 = arith.constant dense<0xFF800000> : vector<8xf32>
    %54 = vector.multi_reduction <maximumf>, %53, %cst_19 [1] : vector<8x8xf32> to vector<8xf32>
    %55 = vector.shape_cast %54 : vector<8xf32> to vector<8x1xf32>
    %56 = vector.broadcast %55 : vector<8x1xf32> to vector<8x8xf32>
    %57 = arith.subf %53, %56 : vector<8x8xf32>
    %58 = math.exp %57 : vector<8x8xf32>
    %cst_20 = arith.constant dense<0.000000e+00> : vector<8xf32>
    %59 = vector.multi_reduction <add>, %58, %cst_20 [1] : vector<8x8xf32> to vector<8xf32>
    %60 = vector.shape_cast %59 : vector<8xf32> to vector<8x1xf32>
    %61 = vector.broadcast %60 : vector<8x1xf32> to vector<8x8xf32>
    %62 = arith.divf %58, %61 : vector<8x8xf32>
    %cst_21 = arith.constant dense<0.000000e+00> : vector<8x8xf32>
    %63 = tpu.matmul %62, %50, %cst_21 {dimension_numbers = #tpu.dot_dimension_numbers<[1], [0], [0], [1], [0, 0, 1, 1], [], []>} : vector<8x8xf32>, vector<8x8xf32>, vector<8x8xf32> -> vector<8x8xf32>
    %64 = vector.extract_strided_slice %14 {offsets = [0, 16], sizes = [8, 8], strides = [1, 1]} : vector<8x96xf32> to vector<8x8xf32>
    %65 = vector.extract_strided_slice %14 {offsets = [0, 48], sizes = [8, 8], strides = [1, 1]} : vector<8x96xf32> to vector<8x8xf32>
    %66 = vector.extract_strided_slice %14 {offsets = [0, 80], sizes = [8, 8], strides = [1, 1]} : vector<8x96xf32> to vector<8x8xf32>
    %cst_22 = arith.constant dense<0.000000e+00> : vector<8x8xf32>
    %67 = tpu.matmul %64, %65, %cst_22 {dimension_numbers = #tpu.dot_dimension_numbers<[1], [1], [0], [0], [0, 0, 1, 0], [], []>} : vector<8x8xf32>, vector<8x8xf32>, vector<8x8xf32> -> vector<8x8xf32>
    %cst_23 = arith.constant 0.353553385 : f32
    %68 = vector.broadcast %cst_23 : f32 to vector<8x8xf32>
    %69 = arith.mulf %67, %68 : vector<8x8xf32>
    %cst_24 = arith.constant dense<0xFF800000> : vector<8xf32>
    %70 = vector.multi_reduction <maximumf>, %69, %cst_24 [1] : vector<8x8xf32> to vector<8xf32>
    %71 = vector.shape_cast %70 : vector<8xf32> to vector<8x1xf32>
    %72 = vector.broadcast %71 : vector<8x1xf32> to vector<8x8xf32>
    %73 = arith.subf %69, %72 : vector<8x8xf32>
    %74 = math.exp %73 : vector<8x8xf32>
    %cst_25 = arith.constant dense<0.000000e+00> : vector<8xf32>
    %75 = vector.multi_reduction <add>, %74, %cst_25 [1] : vector<8x8xf32> to vector<8xf32>
    %76 = vector.shape_cast %75 : vector<8xf32> to vector<8x1xf32>
    %77 = vector.broadcast %76 : vector<8x1xf32> to vector<8x8xf32>
    %78 = arith.divf %74, %77 : vector<8x8xf32>
    %cst_26 = arith.constant dense<0.000000e+00> : vector<8x8xf32>
    %79 = tpu.matmul %78, %66, %cst_26 {dimension_numbers = #tpu.dot_dimension_numbers<[1], [0], [0], [1], [0, 0, 1, 1], [], []>} : vector<8x8xf32>, vector<8x8xf32>, vector<8x8xf32> -> vector<8x8xf32>
    %80 = vector.extract_strided_slice %14 {offsets = [0, 24], sizes = [8, 8], strides = [1, 1]} : vector<8x96xf32> to vector<8x8xf32>
    %81 = vector.extract_strided_slice %14 {offsets = [0, 56], sizes = [8, 8], strides = [1, 1]} : vector<8x96xf32> to vector<8x8xf32>
    %82 = vector.extract_strided_slice %14 {offsets = [0, 88], sizes = [8, 8], strides = [1, 1]} : vector<8x96xf32> to vector<8x8xf32>
    %cst_27 = arith.constant dense<0.000000e+00> : vector<8x8xf32>
    %83 = tpu.matmul %80, %81, %cst_27 {dimension_numbers = #tpu.dot_dimension_numbers<[1], [1], [0], [0], [0, 0, 1, 0], [], []>} : vector<8x8xf32>, vector<8x8xf32>, vector<8x8xf32> -> vector<8x8xf32>
    %cst_28 = arith.constant 0.353553385 : f32
    %84 = vector.broadcast %cst_28 : f32 to vector<8x8xf32>
    %85 = arith.mulf %83, %84 : vector<8x8xf32>
    %cst_29 = arith.constant dense<0xFF800000> : vector<8xf32>
    %86 = vector.multi_reduction <maximumf>, %85, %cst_29 [1] : vector<8x8xf32> to vector<8xf32>
    %87 = vector.shape_cast %86 : vector<8xf32> to vector<8x1xf32>
    %88 = vector.broadcast %87 : vector<8x1xf32> to vector<8x8xf32>
    %89 = arith.subf %85, %88 : vector<8x8xf32>
    %90 = math.exp %89 : vector<8x8xf32>
    %cst_30 = arith.constant dense<0.000000e+00> : vector<8xf32>
    %91 = vector.multi_reduction <add>, %90, %cst_30 [1] : vector<8x8xf32> to vector<8xf32>
    %92 = vector.shape_cast %91 : vector<8xf32> to vector<8x1xf32>
    %93 = vector.broadcast %92 : vector<8x1xf32> to vector<8x8xf32>
    %94 = arith.divf %90, %93 : vector<8x8xf32>
    %cst_31 = arith.constant dense<0.000000e+00> : vector<8x8xf32>
    %95 = tpu.matmul %94, %82, %cst_31 {dimension_numbers = #tpu.dot_dimension_numbers<[1], [0], [0], [1], [0, 0, 1, 1], [], []>} : vector<8x8xf32>, vector<8x8xf32>, vector<8x8xf32> -> vector<8x8xf32>
    %96 = tpu.concatenate %47, %63, %79, %95 in 1 : vector<8x8xf32>, vector<8x8xf32>, vector<8x8xf32>, vector<8x8xf32> -> vector<8x32xf32>
    %97 = vector.extract_strided_slice %31 {offsets = [0, 0], sizes = [8, 8], strides = [1, 1]} : vector<8x96xf32> to vector<8x8xf32>
    %98 = vector.extract_strided_slice %31 {offsets = [0, 32], sizes = [8, 8], strides = [1, 1]} : vector<8x96xf32> to vector<8x8xf32>
    %99 = vector.extract_strided_slice %31 {offsets = [0, 64], sizes = [8, 8], strides = [1, 1]} : vector<8x96xf32> to vector<8x8xf32>
    %cst_32 = arith.constant dense<0.000000e+00> : vector<8x8xf32>
    %100 = tpu.matmul %97, %98, %cst_32 {dimension_numbers = #tpu.dot_dimension_numbers<[1], [1], [0], [0], [0, 0, 1, 0], [], []>} : vector<8x8xf32>, vector<8x8xf32>, vector<8x8xf32> -> vector<8x8xf32>
    %cst_33 = arith.constant 0.353553385 : f32
    %101 = vector.broadcast %cst_33 : f32 to vector<8x8xf32>
    %102 = arith.mulf %100, %101 : vector<8x8xf32>
    %cst_34 = arith.constant dense<0xFF800000> : vector<8xf32>
    %103 = vector.multi_reduction <maximumf>, %102, %cst_34 [1] : vector<8x8xf32> to vector<8xf32>
    %104 = vector.shape_cast %103 : vector<8xf32> to vector<8x1xf32>
    %105 = vector.broadcast %104 : vector<8x1xf32> to vector<8x8xf32>
    %106 = arith.subf %102, %105 : vector<8x8xf32>
    %107 = math.exp %106 : vector<8x8xf32>
    %cst_35 = arith.constant dense<0.000000e+00> : vector<8xf32>
    %108 = vector.multi_reduction <add>, %107, %cst_35 [1] : vector<8x8xf32> to vector<8xf32>
    %109 = vector.shape_cast %108 : vector<8xf32> to vector<8x1xf32>
    %110 = vector.broadcast %109 : vector<8x1xf32> to vector<8x8xf32>
    %111 = arith.divf %107, %110 : vector<8x8xf32>
    %cst_36 = arith.constant dense<0.000000e+00> : vector<8x8xf32>
    %112 = tpu.matmul %111, %99, %cst_36 {dimension_numbers = #tpu.dot_dimension_numbers<[1], [0], [0], [1], [0, 0, 1, 1], [], []>} : vector<8x8xf32>, vector<8x8xf32>, vector<8x8xf32> -> vector<8x8xf32>
    %113 = vector.extract_strided_slice %31 {offsets = [0, 8], sizes = [8, 8], strides = [1, 1]} : vector<8x96xf32> to vector<8x8xf32>
    %114 = vector.extract_strided_slice %31 {offsets = [0, 40], sizes = [8, 8], strides = [1, 1]} : vector<8x96xf32> to vector<8x8xf32>
    %115 = vector.extract_strided_slice %31 {offsets = [0, 72], sizes = [8, 8], strides = [1, 1]} : vector<8x96xf32> to vector<8x8xf32>
    %cst_37 = arith.constant dense<0.000000e+00> : vector<8x8xf32>
    %116 = tpu.matmul %113, %114, %cst_37 {dimension_numbers = #tpu.dot_dimension_numbers<[1], [1], [0], [0], [0, 0, 1, 0], [], []>} : vector<8x8xf32>, vector<8x8xf32>, vector<8x8xf32> -> vector<8x8xf32>
    %cst_38 = arith.constant 0.353553385 : f32
    %117 = vector.broadcast %cst_38 : f32 to vector<8x8xf32>
    %118 = arith.mulf %116, %117 : vector<8x8xf32>
    %cst_39 = arith.constant dense<0xFF800000> : vector<8xf32>
    %119 = vector.multi_reduction <maximumf>, %118, %cst_39 [1] : vector<8x8xf32> to vector<8xf32>
    %120 = vector.shape_cast %119 : vector<8xf32> to vector<8x1xf32>
    %121 = vector.broadcast %120 : vector<8x1xf32> to vector<8x8xf32>
    %122 = arith.subf %118, %121 : vector<8x8xf32>
    %123 = math.exp %122 : vector<8x8xf32>
    %cst_40 = arith.constant dense<0.000000e+00> : vector<8xf32>
    %124 = vector.multi_reduction <add>, %123, %cst_40 [1] : vector<8x8xf32> to vector<8xf32>
    %125 = vector.shape_cast %124 : vector<8xf32> to vector<8x1xf32>
    %126 = vector.broadcast %125 : vector<8x1xf32> to vector<8x8xf32>
    %127 = arith.divf %123, %126 : vector<8x8xf32>
    %cst_41 = arith.constant dense<0.000000e+00> : vector<8x8xf32>
    %128 = tpu.matmul %127, %115, %cst_41 {dimension_numbers = #tpu.dot_dimension_numbers<[1], [0], [0], [1], [0, 0, 1, 1], [], []>} : vector<8x8xf32>, vector<8x8xf32>, vector<8x8xf32> -> vector<8x8xf32>
    %129 = vector.extract_strided_slice %31 {offsets = [0, 16], sizes = [8, 8], strides = [1, 1]} : vector<8x96xf32> to vector<8x8xf32>
    %130 = vector.extract_strided_slice %31 {offsets = [0, 48], sizes = [8, 8], strides = [1, 1]} : vector<8x96xf32> to vector<8x8xf32>
    %131 = vector.extract_strided_slice %31 {offsets = [0, 80], sizes = [8, 8], strides = [1, 1]} : vector<8x96xf32> to vector<8x8xf32>
    %cst_42 = arith.constant dense<0.000000e+00> : vector<8x8xf32>
    %132 = tpu.matmul %129, %130, %cst_42 {dimension_numbers = #tpu.dot_dimension_numbers<[1], [1], [0], [0], [0, 0, 1, 0], [], []>} : vector<8x8xf32>, vector<8x8xf32>, vector<8x8xf32> -> vector<8x8xf32>
    %cst_43 = arith.constant 0.353553385 : f32
    %133 = vector.broadcast %cst_43 : f32 to vector<8x8xf32>
    %134 = arith.mulf %132, %133 : vector<8x8xf32>
    %cst_44 = arith.constant dense<0xFF800000> : vector<8xf32>
    %135 = vector.multi_reduction <maximumf>, %134, %cst_44 [1] : vector<8x8xf32> to vector<8xf32>
    %136 = vector.shape_cast %135 : vector<8xf32> to vector<8x1xf32>
    %137 = vector.broadcast %136 : vector<8x1xf32> to vector<8x8xf32>
    %138 = arith.subf %134, %137 : vector<8x8xf32>
    %139 = math.exp %138 : vector<8x8xf32>
    %cst_45 = arith.constant dense<0.000000e+00> : vector<8xf32>
    %140 = vector.multi_reduction <add>, %139, %cst_45 [1] : vector<8x8xf32> to vector<8xf32>
    %141 = vector.shape_cast %140 : vector<8xf32> to vector<8x1xf32>
    %142 = vector.broadcast %141 : vector<8x1xf32> to vector<8x8xf32>
    %143 = arith.divf %139, %142 : vector<8x8xf32>
    %cst_46 = arith.constant dense<0.000000e+00> : vector<8x8xf32>
    %144 = tpu.matmul %143, %131, %cst_46 {dimension_numbers = #tpu.dot_dimension_numbers<[1], [0], [0], [1], [0, 0, 1, 1], [], []>} : vector<8x8xf32>, vector<8x8xf32>, vector<8x8xf32> -> vector<8x8xf32>
    %145 = vector.extract_strided_slice %31 {offsets = [0, 24], sizes = [8, 8], strides = [1, 1]} : vector<8x96xf32> to vector<8x8xf32>
    %146 = vector.extract_strided_slice %31 {offsets = [0, 56], sizes = [8, 8], strides = [1, 1]} : vector<8x96xf32> to vector<8x8xf32>
    %147 = vector.extract_strided_slice %31 {offsets = [0, 88], sizes = [8, 8], strides = [1, 1]} : vector<8x96xf32> to vector<8x8xf32>
    %cst_47 = arith.constant dense<0.000000e+00> : vector<8x8xf32>
    %148 = tpu.matmul %145, %146, %cst_47 {dimension_numbers = #tpu.dot_dimension_numbers<[1], [1], [0], [0], [0, 0, 1, 0], [], []>} : vector<8x8xf32>, vector<8x8xf32>, vector<8x8xf32> -> vector<8x8xf32>
    %cst_48 = arith.constant 0.353553385 : f32
    %149 = vector.broadcast %cst_48 : f32 to vector<8x8xf32>
    %150 = arith.mulf %148, %149 : vector<8x8xf32>
    %cst_49 = arith.constant dense<0xFF800000> : vector<8xf32>
    %151 = vector.multi_reduction <maximumf>, %150, %cst_49 [1] : vector<8x8xf32> to vector<8xf32>
    %152 = vector.shape_cast %151 : vector<8xf32> to vector<8x1xf32>
    %153 = vector.broadcast %152 : vector<8x1xf32> to vector<8x8xf32>
    %154 = arith.subf %150, %153 : vector<8x8xf32>
    %155 = math.exp %154 : vector<8x8xf32>
    %cst_50 = arith.constant dense<0.000000e+00> : vector<8xf32>
    %156 = vector.multi_reduction <add>, %155, %cst_50 [1] : vector<8x8xf32> to vector<8xf32>
    %157 = vector.shape_cast %156 : vector<8xf32> to vector<8x1xf32>
    %158 = vector.broadcast %157 : vector<8x1xf32> to vector<8x8xf32>
    %159 = arith.divf %155, %158 : vector<8x8xf32>
    %cst_51 = arith.constant dense<0.000000e+00> : vector<8x8xf32>
    %160 = tpu.matmul %159, %147, %cst_51 {dimension_numbers = #tpu.dot_dimension_numbers<[1], [0], [0], [1], [0, 0, 1, 1], [], []>} : vector<8x8xf32>, vector<8x8xf32>, vector<8x8xf32> -> vector<8x8xf32>
    %161 = tpu.concatenate %112, %128, %144, %160 in 1 : vector<8x8xf32>, vector<8x8xf32>, vector<8x8xf32>, vector<8x8xf32> -> vector<8x32xf32>
    %162 = tpu.concatenate %96, %161 in 0 : vector<8x32xf32>, vector<8x32xf32> -> vector<16x32xf32>
    %c0_52 = arith.constant 0 : index
    %c0_53 = arith.constant 0 : index
    %163 = vector.load %arg2[%c0_52, %c0_53] : memref<32x32xf32, #tpu.memory_space<vmem>>, vector<32x32xf32>
    %cst_54 = arith.constant dense<0.000000e+00> : vector<16x32xf32>
    %164 = tpu.matmul %162, %163, %cst_54 {dimension_numbers = #tpu.dot_dimension_numbers<[1], [0], [0], [1], [0, 0, 1, 1], [], []>} : vector<16x32xf32>, vector<32x32xf32>, vector<16x32xf32> -> vector<16x32xf32>
    %c0_55 = arith.constant 0 : index
    %c0_56 = arith.constant 0 : index
    %165 = vector.load %arg3[%c0_55, %c0_56] : memref<1x32xf32, #tpu.memory_space<vmem>>, vector<1x32xf32>
    %166 = vector.broadcast %165 : vector<1x32xf32> to vector<16x32xf32>
    %167 = arith.addf %164, %166 : vector<16x32xf32>
    %c0_57 = arith.constant 0 : index
    %c0_58 = arith.constant 0 : index
    %168 = vector.load %arg4[%c0_57, %c0_58] : memref<16x32xf32, #tpu.memory_space<vmem>>, vector<16x32xf32>
    tpu.vector_store %arg4[%c0_57, %c0_58], %167 {strides = array<i32>} : memref<16x32xf32, #tpu.memory_space<vmem>>, vector<16x32xf32>,
    return
  }
}

</mosaic_0001>

<llo_original>
// kernel: spike_self_attention.1
$region0: #{spike_self_attention.1}
  #allocation0 [shape = 'u32[]', space=smem, size = 0x4, offset = 0x4, fixed_abs, tag = 'smem constant byte address 0x4 - core index']
  #allocation1 [shape = 'u32[72,128]{1,0:T(1,128)}', space=vmem, size = 0x9000, scoped, tag = 'internal scratch']
  %s0 = inlined_call_operand.hbm [shape: f32[16,32], index: 0, kind: input, shape index: {}]
  %s1 = inlined_call_operand.hbm [shape: f32[32,96], index: 1, kind: input, shape index: {}]
  %s2 = inlined_call_operand.hbm [shape: f32[32,32], index: 2, kind: input, shape index: {}]
  %s3 = inlined_call_operand.vmem [shape: f32[1,32], index: 3, kind: input, shape index: {}]
  %s4 = inlined_call_operand.hbm [shape: f32[16,32], index: 4, kind: output, shape index: {}]
  %s5 = sld [smem:[#allocation0]]
  $region38: #{spike_self_attention.1} parent=0
    _
  %s7 = ssub.s32 1, %s5
  %s8 = scalar_select 0, %s7, %s5
  $region1: #{spike_self_attention.1} parent=0
    #allocation2 [shape = 'u8[8192]{0}', space=vmem, size = 0x2000, scoped, tag = 'input window, operand 0, single buffered']
    #allocation3 [shape = 's32[1]{0}', space=sflag, size = 0x4, scoped, tag = 'scoped memory for spike_self_attention.1']
    #allocation4 [shape = 's32[1]{0}', space=sflag, size = 0x4, scoped, tag = 'scoped memory for spike_self_attention.1']
    #allocation5 [shape = 'u8[16384]{0}', space=vmem, size = 0x4000, scoped, tag = 'input window, operand 1, single buffered']
    #allocation6 [shape = 's32[1]{0}', space=sflag, size = 0x4, scoped, tag = 'scoped memory for spike_self_attention.1']
    #allocation7 [shape = 'u8[16384]{0}', space=vmem, size = 0x4000, scoped, tag = 'input window, operand 2, single buffered']
    #allocation8 [shape = 'u8[8192]{0}', space=vmem, size = 0x2000, scoped, tag = 'output window, operand 0, single buffered']
    %9 = vsyncpa [#allocation3], 0
    %10 = vsyncpa [#allocation6], 0
    %11 = vsyncpa [#allocation4], 0
    // Predicated region
    $region2: #{spike_self_attention.1} parent=1 // pred_check
      _
    $region3: #{spike_self_attention.1} parent=1 // pred_check_branch
      %13 = sbr.rel (0) target = $region5
    $region4: #{spike_self_attention.1} parent=1 // pred_region
      %15 = vsyncadd [#allocation3], 0
      %s16 = sshll.u32 %s0, 4
      %s17 = int_to_ptr.hbm [resolvable:$true] %s16
      %s18 = sshll.u32 [#allocation2], 4
      %s19 = int_to_ptr.vmem [resolvable:$true] %s18
      %24 = dma.hbm_to_vmem [thread:$0]  %s17, 256, %s19, [#allocation3], 128, 128, 8
    $region5: #{spike_self_attention.1} parent=1 // pred_fallthru
      _
    // Predicated region
    $region6: #{spike_self_attention.1} parent=1 // pred_check
      _
    $region7: #{spike_self_attention.1} parent=1 // pred_check_branch
      %26 = sbr.rel (0) target = $region9
    $region8: #{spike_self_attention.1} parent=1 // pred_region
      %28 = vsyncadd [#allocation6], 0
      %s29 = sshll.u32 %s1, 4
      %s30 = int_to_ptr.hbm [resolvable:$true] %s29
      %s31 = sshll.u32 [#allocation5], 4
      %s32 = int_to_ptr.vmem [resolvable:$true] %s31
      %37 = dma.hbm_to_vmem [thread:$0]  %s30, 512, %s32, [#allocation6], 128, 128, 8
    $region9: #{spike_self_attention.1} parent=1 // pred_fallthru
      _
    // Predicated region
    $region10: #{spike_self_attention.1} parent=1 // pred_check
      _
    $region11: #{spike_self_attention.1} parent=1 // pred_check_branch
      %39 = sbr.rel (0) target = $region13
    $region12: #{spike_self_attention.1} parent=1 // pred_region
      %41 = vsyncadd [#allocation6], 0
      %s42 = sshll.u32 %s2, 4
      %s43 = int_to_ptr.hbm [resolvable:$true] %s42
      %s44 = sshll.u32 [#allocation7], 4
      %s45 = int_to_ptr.vmem [resolvable:$true] %s44
      %50 = dma.hbm_to_vmem [thread:$0]  %s43, 512, %s45, [#allocation6], 128, 128, 8
    $region13: #{spike_self_attention.1} parent=1 // pred_fallthru
      _
    // Predicated region
    $region14: #{spike_self_attention.1} parent=1 // pred_check
      _
    $region15: #{spike_self_attention.1} parent=1 // pred_check_branch
      %52 = sbr.rel (0) target = $region17
    $region16: #{spike_self_attention.1} parent=1 // pred_region
      _
    $region17: #{spike_self_attention.1} parent=1 // pred_fallthru
      _
    // Predicated region
    $region18: #{spike_self_attention.1} parent=1 // pred_check
      _
    $region19: #{spike_self_attention.1} parent=1 // pred_check_branch
      %54 = sbr.rel (0) target = $region21
    $region20: #{spike_self_attention.1} parent=1 // pred_region
      %56 = dma.done [#allocation3], 256
    $region21: #{spike_self_attention.1} parent=1 // pred_fallthru
      _
    // Predicated region
    $region22: #{spike_self_attention.1} parent=1 // pred_check
      _
    $region23: #{spike_self_attention.1} parent=1 // pred_check_branch
      %58 = sbr.rel (0) target = $region25
    $region24: #{spike_self_attention.1} parent=1 // pred_region
      %60 = dma.done [#allocation6], 512
    $region25: #{spike_self_attention.1} parent=1 // pred_fallthru
      _
    // Predicated region
    $region26: #{spike_self_attention.1} parent=1 // pred_check
      _
    $region27: #{spike_self_attention.1} parent=1 // pred_check_branch
      %62 = sbr.rel (0) target = $region29
    $region28: #{spike_self_attention.1} parent=1 // pred_region
      %64 = dma.done [#allocation6], 512
    $region29: #{spike_self_attention.1} parent=1 // pred_fallthru
      _
    %v65 = vld [vmem:[#allocation2] sm:$0xff]
    %v66 = vld [vmem:[#allocation2 + $0x8] sm:$0xff]
    %v67 = vld [vmem:[#allocation5] sm:$0xff]
    %v68 = vld [vmem:[#allocation5 + $0x8] sm:$0xff]
    %v69 = vld [vmem:[#allocation5 + $0x10] sm:$0xff]
    %v70 = vld [vmem:[#allocation5 + $0x18] sm:$0xff]
    %vm71 = vcmask 261120
    %v73 = vsel %vm71, %v65, 0
    %v76 = vsel %vm71, %v66, 0
    %78 = vmatpush.msra.mxu0 0.0
    %79 = vmatpush.msra.mxu0 0.0
    %80 = vmatpush.msra.mxu0 0.0
    %81 = vmatpush.msra.mxu0 0.0
    %82 = vmatpush.msra.mxu0 0.0
    %83 = vmatpush.msra.mxu0 0.0
    %84 = vmatpush.msra.mxu0 0.0
    %85 = vmatpush.msra.mxu0 0.0
    %86 = vmatpush.msra.mxu0 0.0
    %87 = vmatpush.msra.mxu0 0.0
    %88 = vmatpush.msra.mxu0 0.0
    %89 = vmatpush.msra.mxu0 0.0
    %90 = vmatpush.msra.mxu0 %v70
    %91 = vmatpush.msra.mxu0 %v69
    %92 = vmatpush.msra.mxu0 %v68
    %93 = vmatpush.msra.mxu0 %v67
    %94 = vmatmul.f32.gmra.mxu0 %v73
    %v95 = vpop.f32.mrf.mxu0
    %v96 = vadd.f32 0.0, %v95
    %97 = vmatmul.f32.gmra.mxu0 %v76
    %v98 = vpop.f32.mrf.mxu0
    %v99 = vadd.f32 0.0, %v98
    %100 = vdwg.mxu0
    %v101 = vrcp.pop 2.0
    %v102 = vmul.f32 2.0, %v101
    %v103 = vsub.f32 1.0, %v102
    %v104 = vmul.f32 %v101, %v103
    %v105 = vadd.f32 %v101, %v104
    %vm106 = vweird.f32 %v101
    %v107 = vsel %vm106, %v101, %v105
    %v108 = vmul.f32 %v96, %v107
    %v109 = vadd.f32 %v108, 0.0
    %vm110 = vcmp.ge.f32.partialorder %v109, 1.0
    %v111 = vsel %vm110, 1, 0
    %v112 = vcvt.s32.f32 %v111
    %v113 = vsub.f32 1.0, %v112
    %v114 = vmul.f32 %v109, %v113
    %v115 = vmul.f32 %v112, 0.0
    %v116 = vadd.f32 %v114, %v115
    %v117 = vsub.f32 %v99, %v116
    %v118 = vmul.f32 %v117, %v107
    %v119 = vadd.f32 %v116, %v118
    %vm120 = vcmp.ge.f32.partialorder %v119, 1.0
    %v121 = vsel %vm120, 1, 0
    %v122 = vcvt.s32.f32 %v121
    %124 = vrot.lane.b32.xlu0 %v112, 96
    %v125 = vpop.permute.xlu0 %124
    %vm126 = vcmask 64512
    %v127 = vsel %vm126, %v112, 0
    %v129 = vsel %vm126, %v125, 0
    %131 = vmatpush.xpose.msra.mxu0 0.0
    %132 = vmatpush.xpose.msra.mxu0 0.0
    %133 = vmatpush.xpose.msra.mxu0 0.0
    %134 = vmatpush.xpose.msra.mxu0 0.0
    %135 = vmatpush.xpose.msra.mxu0 0.0
    %136 = vmatpush.xpose.msra.mxu0 0.0
    %137 = vmatpush.xpose.msra.mxu0 0.0
    %138 = vmatpush.xpose.msra.mxu0 0.0
    %139 = vmatpush.xpose.msra.mxu0 0.0
    %140 = vmatpush.xpose.msra.mxu0 0.0
    %141 = vmatpush.xpose.msra.mxu0 0.0
    %142 = vmatpush.xpose.msra.mxu0 0.0
    %143 = vmatpush.xpose.msra.mxu0 0.0
    %144 = vmatpush.xpose.msra.mxu0 0.0
    %145 = vmatpush.xpose.msra.mxu0 0.0
    %146 = vmatpush.xpose.msra.mxu0 %v129
    %147 = vmatmul.f32.gmra.mxu0 %v127
    %v148 = vpop.f32.mrf.mxu0
    %v149 = vadd.f32 0.0, %v148
    %150 = vdwg.mxu0
    %v151 = vmul.f32 %v149, 0.35355338
    %v152 = vsel %vm126, %v151, -inf
    %153 = vmax.xlane.f32.xlu0 %v152
    %v154 = vpop.xlane.xlu0 %153
    %v155 = vsub.f32 %v151, %v154
    %v156 = vmul.f32 %v155, 1.442695
    %v157 = vpow.pop %v156
    %v158 = vsel %vm126, %v157, 0.0
    %159 = vadd.xlane.f32.xlu0 %v158
    %v160 = vpop.xlane.xlu0 %159
    %v161 = vrcp.pop %v160
    %v162 = vmul.f32 %v160, %v161
    %v163 = vsub.f32 1.0, %v162
    %v164 = vmul.f32 %v161, %v163
    %v165 = vadd.f32 %v161, %v164
    %vm166 = vweird.f32 %v160
    %vm167 = vweird.f32 %v161
    %vm168 = vmor %vm166, %vm167
    %v169 = vsel %vm168, %v161, %v165
    %v170 = vand.u32 2147483647, %v160
    %vm171 = vcmp.eq.f32.partialorder %v170, 8.507059e+37
    %v172 = vand.u32 %v160, 2147483648
    %v173 = vor.u32 1.1754944e-38, %v172
    %v174 = vsel %vm171, %v173, %v169
    %v175 = vmul.f32 %v157, %v174
    %176 = vrot.lane.b32.xlu0 %v112, 64
    %v177 = vpop.permute.xlu0 %176
    %v180 = vsel %vm126, %v175, 0
    %182 = vmatpush.msra.mxu0 0.0
    %183 = vmatpush.msra.mxu0 0.0
    %184 = vmatpush.msra.mxu0 0.0
    %185 = vmatpush.msra.mxu0 0.0
    %186 = vmatpush.msra.mxu0 0.0
    %187 = vmatpush.msra.mxu0 0.0
    %188 = vmatpush.msra.mxu0 0.0
    %189 = vmatpush.msra.mxu0 0.0
    %190 = vmatpush.msra.mxu0 0.0
    %191 = vmatpush.msra.mxu0 0.0
    %192 = vmatpush.msra.mxu0 0.0
    %193 = vmatpush.msra.mxu0 0.0
    %194 = vmatpush.msra.mxu0 0.0
    %195 = vmatpush.msra.mxu0 0.0
    %196 = vmatpush.msra.mxu0 0.0
    %197 = vmatpush.msra.mxu0 %v177
    %198 = vmatmul.f32.gmra.mxu0 %v180
    %v199 = vpop.f32.mrf.mxu0
    %v200 = vadd.f32 0.0, %v199
    %201 = vdwg.mxu0
    %202 = vrot.lane.b32.xlu0 %v112, 120
    %v203 = vpop.permute.xlu0 %202
    %204 = vrot.lane.b32.xlu0 %v112, 88
    %v205 = vpop.permute.xlu0 %204
    %v206 = vsel %vm126, %v203, 0
    %v208 = vsel %vm126, %v205, 0
    %210 = vmatpush.xpose.msra.mxu0 0.0
    %211 = vmatpush.xpose.msra.mxu0 0.0
    %212 = vmatpush.xpose.msra.mxu0 0.0
    %213 = vmatpush.xpose.msra.mxu0 0.0
    %214 = vmatpush.xpose.msra.mxu0 0.0
    %215 = vmatpush.xpose.msra.mxu0 0.0
    %216 = vmatpush.xpose.msra.mxu0 0.0
    %217 = vmatpush.xpose.msra.mxu0 0.0
    %218 = vmatpush.xpose.msra.mxu0 0.0
    %219 = vmatpush.xpose.msra.mxu0 0.0
    %220 = vmatpush.xpose.msra.mxu0 0.0
    %221 = vmatpush.xpose.msra.mxu0 0.0
    %222 = vmatpush.xpose.msra.mxu0 0.0
    %223 = vmatpush.xpose.msra.mxu0 0.0
    %224 = vmatpush.xpose.msra.mxu0 0.0
    %225 = vmatpush.xpose.msra.mxu0 %v208
    %226 = vmatmul.f32.gmra.mxu0 %v206
    %v227 = vpop.f32.mrf.mxu0
    %v228 = vadd.f32 0.0, %v227
    %229 = vdwg.mxu0
    %v230 = vmul.f32 %v228, 0.35355338
    %v231 = vsel %vm126, %v230, -inf
    %232 = vmax.xlane.f32.xlu0 %v231
    %v233 = vpop.xlane.xlu0 %232
    %v234 = vsub.f32 %v230, %v233
    %v235 = vmul.f32 %v234, 1.442695
    %v236 = vpow.pop %v235
    %v237 = vsel %vm126, %v236, 0.0
    %238 = vadd.xlane.f32.xlu0 %v237
    %v239 = vpop.xlane.xlu0 %238
    %v240 = vrcp.pop %v239
    %v241 = vmul.f32 %v239, %v240
    %v242 = vsub.f32 1.0, %v241
    %v243 = vmul.f32 %v240, %v242
    %v244 = vadd.f32 %v240, %v243
    %vm245 = vweird.f32 %v239
    %vm246 = vweird.f32 %v240
    %vm247 = vmor %vm245, %vm246
    %v248 = vsel %vm247, %v240, %v244
    %v249 = vand.u32 2147483647, %v239
    %vm250 = vcmp.eq.f32.partialorder %v249, 8.507059e+37
    %v251 = vand.u32 %v239, 2147483648
    %v252 = vor.u32 1.1754944e-38, %v251
    %v253 = vsel %vm250, %v252, %v248
    %v254 = vmul.f32 %v236, %v253
    %255 = vrot.lane.b32.xlu0 %v112, 56
    %v256 = vpop.permute.xlu0 %255
    %v259 = vsel %vm126, %v254, 0
    %261 = vmatpush.msra.mxu0 0.0
    %262 = vmatpush.msra.mxu0 0.0
    %263 = vmatpush.msra.mxu0 0.0
    %264 = vmatpush.msra.mxu0 0.0
    %265 = vmatpush.msra.mxu0 0.0
    %266 = vmatpush.msra.mxu0 0.0
    %267 = vmatpush.msra.mxu0 0.0
    %268 = vmatpush.msra.mxu0 0.0
    %269 = vmatpush.msra.mxu0 0.0
    %270 = vmatpush.msra.mxu0 0.0
    %271 = vmatpush.msra.mxu0 0.0
    %272 = vmatpush.msra.mxu0 0.0
    %273 = vmatpush.msra.mxu0 0.0
    %274 = vmatpush.msra.mxu0 0.0
    %275 = vmatpush.msra.mxu0 0.0
    %276 = vmatpush.msra.mxu0 %v256
    %277 = vmatmul.f32.gmra.mxu0 %v259
    %v278 = vpop.f32.mrf.mxu0
    %v279 = vadd.f32 0.0, %v278
    %280 = vdwg.mxu0
    %281 = vrot.lane.b32.xlu0 %v112, 112
    %v282 = vpop.permute.xlu0 %281
    %283 = vrot.lane.b32.xlu0 %v112, 80
    %v284 = vpop.permute.xlu0 %283
    %v285 = vsel %vm126, %v282, 0
    %v287 = vsel %vm126, %v284, 0
    %289 = vmatpush.xpose.msra.mxu0 0.0
    %290 = vmatpush.xpose.msra.mxu0 0.0
    %291 = vmatpush.xpose.msra.mxu0 0.0
    %292 = vmatpush.xpose.msra.mxu0 0.0
    %293 = vmatpush.xpose.msra.mxu0 0.0
    %294 = vmatpush.xpose.msra.mxu0 0.0
    %295 = vmatpush.xpose.msra.mxu0 0.0
    %296 = vmatpush.xpose.msra.mxu0 0.0
    %297 = vmatpush.xpose.msra.mxu0 0.0
    %298 = vmatpush.xpose.msra.mxu0 0.0
    %299 = vmatpush.xpose.msra.mxu0 0.0
    %300 = vmatpush.xpose.msra.mxu0 0.0
    %301 = vmatpush.xpose.msra.mxu0 0.0
    %302 = vmatpush.xpose.msra.mxu0 0.0
    %303 = vmatpush.xpose.msra.mxu0 0.0
    %304 = vmatpush.xpose.msra.mxu0 %v287
    %305 = vmatmul.f32.gmra.mxu0 %v285
    %v306 = vpop.f32.mrf.mxu0
    %v307 = vadd.f32 0.0, %v306
    %308 = vdwg.mxu0
    %v309 = vmul.f32 %v307, 0.35355338
    %v310 = vsel %vm126, %v309, -inf
    %311 = vmax.xlane.f32.xlu0 %v310
    %v312 = vpop.xlane.xlu0 %311
    %v313 = vsub.f32 %v309, %v312
    %v314 = vmul.f32 %v313, 1.442695
    %v315 = vpow.pop %v314
    %v316 = vsel %vm126, %v315, 0.0
    %317 = vadd.xlane.f32.xlu0 %v316
    %v318 = vpop.xlane.xlu0 %317
    %v319 = vrcp.pop %v318
    %v320 = vmul.f32 %v318, %v319
    %v321 = vsub.f32 1.0, %v320
    %v322 = vmul.f32 %v319, %v321
    %v323 = vadd.f32 %v319, %v322
    %vm324 = vweird.f32 %v318
    %vm325 = vweird.f32 %v319
    %vm326 = vmor %vm324, %vm325
    %v327 = vsel %vm326, %v319, %v323
    %v328 = vand.u32 2147483647, %v318
    %vm329 = vcmp.eq.f32.partialorder %v328, 8.507059e+37
    %v330 = vand.u32 %v318, 2147483648
    %v331 = vor.u32 1.1754944e-38, %v330
    %v332 = vsel %vm329, %v331, %v327
    %v333 = vmul.f32 %v315, %v332
    %334 = vrot.lane.b32.xlu0 %v112, 48
    %v335 = vpop.permute.xlu0 %334
    %v338 = vsel %vm126, %v333, 0
    %340 = vmatpush.msra.mxu0 0.0
    %341 = vmatpush.msra.mxu0 0.0
    %342 = vmatpush.msra.mxu0 0.0
    %343 = vmatpush.msra.mxu0 0.0
    %344 = vmatpush.msra.mxu0 0.0
    %345 = vmatpush.msra.mxu0 0.0
    %346 = vmatpush.msra.mxu0 0.0
    %347 = vmatpush.msra.mxu0 0.0
    %348 = vmatpush.msra.mxu0 0.0
    %349 = vmatpush.msra.mxu0 0.0
    %350 = vmatpush.msra.mxu0 0.0
    %351 = vmatpush.msra.mxu0 0.0
    %352 = vmatpush.msra.mxu0 0.0
    %353 = vmatpush.msra.mxu0 0.0
    %354 = vmatpush.msra.mxu0 0.0
    %355 = vmatpush.msra.mxu0 %v335
    %356 = vmatmul.f32.gmra.mxu0 %v338
    %v357 = vpop.f32.mrf.mxu0
    %v358 = vadd.f32 0.0, %v357
    %359 = vdwg.mxu0
    %360 = vrot.lane.b32.xlu0 %v112, 104
    %v361 = vpop.permute.xlu0 %360
    %362 = vrot.lane.b32.xlu0 %v112, 72
    %v363 = vpop.permute.xlu0 %362
    %v364 = vsel %vm126, %v361, 0
    %v366 = vsel %vm126, %v363, 0
    %368 = vmatpush.xpose.msra.mxu0 0.0
    %369 = vmatpush.xpose.msra.mxu0 0.0
    %370 = vmatpush.xpose.msra.mxu0 0.0
    %371 = vmatpush.xpose.msra.mxu0 0.0
    %372 = vmatpush.xpose.msra.mxu0 0.0
    %373 = vmatpush.xpose.msra.mxu0 0.0
    %374 = vmatpush.xpose.msra.mxu0 0.0
    %375 = vmatpush.xpose.msra.mxu0 0.0
    %376 = vmatpush.xpose.msra.mxu0 0.0
    %377 = vmatpush.xpose.msra.mxu0 0.0
    %378 = vmatpush.xpose.msra.mxu0 0.0
    %379 = vmatpush.xpose.msra.mxu0 0.0
    %380 = vmatpush.xpose.msra.mxu0 0.0
    %381 = vmatpush.xpose.msra.mxu0 0.0
    %382 = vmatpush.xpose.msra.mxu0 0.0
    %383 = vmatpush.xpose.msra.mxu0 %v366
    %384 = vmatmul.f32.gmra.mxu0 %v364
    %v385 = vpop.f32.mrf.mxu0
    %v386 = vadd.f32 0.0, %v385
    %387 = vdwg.mxu0
    %v388 = vmul.f32 %v386, 0.35355338
    %v389 = vsel %vm126, %v388, -inf
    %390 = vmax.xlane.f32.xlu0 %v389
    %v391 = vpop.xlane.xlu0 %390
    %v392 = vsub.f32 %v388, %v391
    %v393 = vmul.f32 %v392, 1.442695
    %v394 = vpow.pop %v393
    %v395 = vsel %vm126, %v394, 0.0
    %396 = vadd.xlane.f32.xlu0 %v395
    %v397 = vpop.xlane.xlu0 %396
    %v398 = vrcp.pop %v397
    %v399 = vmul.f32 %v397, %v398
    %v400 = vsub.f32 1.0, %v399
    %v401 = vmul.f32 %v398, %v400
    %v402 = vadd.f32 %v398, %v401
    %vm403 = vweird.f32 %v397
    %vm404 = vweird.f32 %v398
    %vm405 = vmor %vm403, %vm404
    %v406 = vsel %vm405, %v398, %v402
    %v407 = vand.u32 2147483647, %v397
    %vm408 = vcmp.eq.f32.partialorder %v407, 8.507059e+37
    %v409 = vand.u32 %v397, 2147483648
    %v410 = vor.u32 1.1754944e-38, %v409
    %v411 = vsel %vm408, %v410, %v406
    %v412 = vmul.f32 %v394, %v411
    %413 = vrot.lane.b32.xlu0 %v112, 40
    %v414 = vpop.permute.xlu0 %413
    %v417 = vsel %vm126, %v412, 0
    %419 = vmatpush.msra.mxu0 0.0
    %420 = vmatpush.msra.mxu0 0.0
    %421 = vmatpush.msra.mxu0 0.0
    %422 = vmatpush.msra.mxu0 0.0
    %423 = vmatpush.msra.mxu0 0.0
    %424 = vmatpush.msra.mxu0 0.0
    %425 = vmatpush.msra.mxu0 0.0
    %426 = vmatpush.msra.mxu0 0.0
    %427 = vmatpush.msra.mxu0 0.0
    %428 = vmatpush.msra.mxu0 0.0
    %429 = vmatpush.msra.mxu0 0.0
    %430 = vmatpush.msra.mxu0 0.0
    %431 = vmatpush.msra.mxu0 0.0
    %432 = vmatpush.msra.mxu0 0.0
    %433 = vmatpush.msra.mxu0 0.0
    %434 = vmatpush.msra.mxu0 %v414
    %435 = vmatmul.f32.gmra.mxu0 %v417
    %v436 = vpop.f32.mrf.mxu0
    %v437 = vadd.f32 0.0, %v436
    %438 = vdwg.mxu0
    %440 = vrot.lane.b32.xlu0 %v279, 8
    %v441 = vpop.permute.xlu0 %440
    %444 = vrot.lane.b32.xlu0 %v358, 16
    %v445 = vpop.permute.xlu0 %444
    %448 = vrot.lane.b32.xlu0 %v437, 24
    %v449 = vpop.permute.xlu0 %448
    %v451 = vsel %vm126, %v200, %v441
    %vm452 = vcmask 130048
    %v453 = vsel %vm452, %v451, %v445
    %vm454 = vcmask 195584
    %v455 = vsel %vm454, %v453, %v449
    %457 = vrot.lane.b32.xlu0 %v122, 96
    %v458 = vpop.permute.xlu0 %457
    %v459 = vsel %vm126, %v122, 0
    %v461 = vsel %vm126, %v458, 0
    %463 = vmatpush.xpose.msra.mxu0 0.0
    %464 = vmatpush.xpose.msra.mxu0 0.0
    %465 = vmatpush.xpose.msra.mxu0 0.0
    %466 = vmatpush.xpose.msra.mxu0 0.0
    %467 = vmatpush.xpose.msra.mxu0 0.0
    %468 = vmatpush.xpose.msra.mxu0 0.0
    %469 = vmatpush.xpose.msra.mxu0 0.0
    %470 = vmatpush.xpose.msra.mxu0 0.0
    %471 = vmatpush.xpose.msra.mxu0 0.0
    %472 = vmatpush.xpose.msra.mxu0 0.0
    %473 = vmatpush.xpose.msra.mxu0 0.0
    %474 = vmatpush.xpose.msra.mxu0 0.0
    %475 = vmatpush.xpose.msra.mxu0 0.0
    %476 = vmatpush.xpose.msra.mxu0 0.0
    %477 = vmatpush.xpose.msra.mxu0 0.0
    %478 = vmatpush.xpose.msra.mxu0 %v461
    %479 = vmatmul.f32.gmra.mxu0 %v459
    %v480 = vpop.f32.mrf.mxu0
    %v481 = vadd.f32 0.0, %v480
    %482 = vdwg.mxu0
    %v483 = vmul.f32 %v481, 0.35355338
    %v484 = vsel %vm126, %v483, -inf
    %485 = vmax.xlane.f32.xlu0 %v484
    %v486 = vpop.xlane.xlu0 %485
    %v487 = vsub.f32 %v483, %v486
    %v488 = vmul.f32 %v487, 1.442695
    %v489 = vpow.pop %v488
    %v490 = vsel %vm126, %v489, 0.0
    %491 = vadd.xlane.f32.xlu0 %v490
    %v492 = vpop.xlane.xlu0 %491
    %v493 = vrcp.pop %v492
    %v494 = vmul.f32 %v492, %v493
    %v495 = vsub.f32 1.0, %v494
    %v496 = vmul.f32 %v493, %v495
    %v497 = vadd.f32 %v493, %v496
    %vm498 = vweird.f32 %v492
    %vm499 = vweird.f32 %v493
    %vm500 = vmor %vm498, %vm499
    %v501 = vsel %vm500, %v493, %v497
    %v502 = vand.u32 2147483647, %v492
    %vm503 = vcmp.eq.f32.partialorder %v502, 8.507059e+37
    %v504 = vand.u32 %v492, 2147483648
    %v505 = vor.u32 1.1754944e-38, %v504
    %v506 = vsel %vm503, %v505, %v501
    %v507 = vmul.f32 %v489, %v506
    %508 = vrot.lane.b32.xlu0 %v122, 64
    %v509 = vpop.permute.xlu0 %508
    %v512 = vsel %vm126, %v507, 0
    %514 = vmatpush.msra.mxu0 0.0
    %515 = vmatpush.msra.mxu0 0.0
    %516 = vmatpush.msra.mxu0 0.0
    %517 = vmatpush.msra.mxu0 0.0
    %518 = vmatpush.msra.mxu0 0.0
    %519 = vmatpush.msra.mxu0 0.0
    %520 = vmatpush.msra.mxu0 0.0
    %521 = vmatpush.msra.mxu0 0.0
    %522 = vmatpush.msra.mxu0 0.0
    %523 = vmatpush.msra.mxu0 0.0
    %524 = vmatpush.msra.mxu0 0.0
    %525 = vmatpush.msra.mxu0 0.0
    %526 = vmatpush.msra.mxu0 0.0
    %527 = vmatpush.msra.mxu0 0.0
    %528 = vmatpush.msra.mxu0 0.0
    %529 = vmatpush.msra.mxu0 %v509
    %530 = vmatmul.f32.gmra.mxu0 %v512
    %v531 = vpop.f32.mrf.mxu0
    %v532 = vadd.f32 0.0, %v531
    %533 = vdwg.mxu0
    %534 = vrot.lane.b32.xlu0 %v122, 120
    %v535 = vpop.permute.xlu0 %534
    %536 = vrot.lane.b32.xlu0 %v122, 88
    %v537 = vpop.permute.xlu0 %536
    %v538 = vsel %vm126, %v535, 0
    %v540 = vsel %vm126, %v537, 0
    %542 = vmatpush.xpose.msra.mxu0 0.0
    %543 = vmatpush.xpose.msra.mxu0 0.0
    %544 = vmatpush.xpose.msra.mxu0 0.0
    %545 = vmatpush.xpose.msra.mxu0 0.0
    %546 = vmatpush.xpose.msra.mxu0 0.0
    %547 = vmatpush.xpose.msra.mxu0 0.0
    %548 = vmatpush.xpose.msra.mxu0 0.0
    %549 = vmatpush.xpose.msra.mxu0 0.0
    %550 = vmatpush.xpose.msra.mxu0 0.0
    %551 = vmatpush.xpose.msra.mxu0 0.0
    %552 = vmatpush.xpose.msra.mxu0 0.0
    %553 = vmatpush.xpose.msra.mxu0 0.0
    %554 = vmatpush.xpose.msra.mxu0 0.0
    %555 = vmatpush.xpose.msra.mxu0 0.0
    %556 = vmatpush.xpose.msra.mxu0 0.0
    %557 = vmatpush.xpose.msra.mxu0 %v540
    %558 = vmatmul.f32.gmra.mxu0 %v538
    %v559 = vpop.f32.mrf.mxu0
    %v560 = vadd.f32 0.0, %v559
    %561 = vdwg.mxu0
    %v562 = vmul.f32 %v560, 0.35355338
    %v563 = vsel %vm126, %v562, -inf
    %564 = vmax.xlane.f32.xlu0 %v563
    %v565 = vpop.xlane.xlu0 %564
    %v566 = vsub.f32 %v562, %v565
    %v567 = vmul.f32 %v566, 1.442695
    %v568 = vpow.pop %v567
    %v569 = vsel %vm126, %v568, 0.0
    %570 = vadd.xlane.f32.xlu0 %v569
    %v571 = vpop.xlane.xlu0 %570
    %v572 = vrcp.pop %v571
    %v573 = vmul.f32 %v571, %v572
    %v574 = vsub.f32 1.0, %v573
    %v575 = vmul.f32 %v572, %v574
    %v576 = vadd.f32 %v572, %v575
    %vm577 = vweird.f32 %v571
    %vm578 = vweird.f32 %v572
    %vm579 = vmor %vm577, %vm578
    %v580 = vsel %vm579, %v572, %v576
    %v581 = vand.u32 2147483647, %v571
    %vm582 = vcmp.eq.f32.partialorder %v581, 8.507059e+37
    %v583 = vand.u32 %v571, 2147483648
    %v584 = vor.u32 1.1754944e-38, %v583
    %v585 = vsel %vm582, %v584, %v580
    %v586 = vmul.f32 %v568, %v585
    %587 = vrot.lane.b32.xlu0 %v122, 56
    %v588 = vpop.permute.xlu0 %587
    %v591 = vsel %vm126, %v586, 0
    %593 = vmatpush.msra.mxu0 0.0
    %594 = vmatpush.msra.mxu0 0.0
    %595 = vmatpush.msra.mxu0 0.0
    %596 = vmatpush.msra.mxu0 0.0
    %597 = vmatpush.msra.mxu0 0.0
    %598 = vmatpush.msra.mxu0 0.0
    %599 = vmatpush.msra.mxu0 0.0
    %600 = vmatpush.msra.mxu0 0.0
    %601 = vmatpush.msra.mxu0 0.0
    %602 = vmatpush.msra.mxu0 0.0
    %603 = vmatpush.msra.mxu0 0.0
    %604 = vmatpush.msra.mxu0 0.0
    %605 = vmatpush.msra.mxu0 0.0
    %606 = vmatpush.msra.mxu0 0.0
    %607 = vmatpush.msra.mxu0 0.0
    %608 = vmatpush.msra.mxu0 %v588
    %609 = vmatmul.f32.gmra.mxu0 %v591
    %v610 = vpop.f32.mrf.mxu0
    %v611 = vadd.f32 0.0, %v610
    %612 = vdwg.mxu0
    %613 = vrot.lane.b32.xlu0 %v122, 112
    %v614 = vpop.permute.xlu0 %613
    %615 = vrot.lane.b32.xlu0 %v122, 80
    %v616 = vpop.permute.xlu0 %615
    %v617 = vsel %vm126, %v614, 0
    %v619 = vsel %vm126, %v616, 0
    %621 = vmatpush.xpose.msra.mxu0 0.0
    %622 = vmatpush.xpose.msra.mxu0 0.0
    %623 = vmatpush.xpose.msra.mxu0 0.0
    %624 = vmatpush.xpose.msra.mxu0 0.0
    %625 = vmatpush.xpose.msra.mxu0 0.0
    %626 = vmatpush.xpose.msra.mxu0 0.0
    %627 = vmatpush.xpose.msra.mxu0 0.0
    %628 = vmatpush.xpose.msra.mxu0 0.0
    %629 = vmatpush.xpose.msra.mxu0 0.0
    %630 = vmatpush.xpose.msra.mxu0 0.0
    %631 = vmatpush.xpose.msra.mxu0 0.0
    %632 = vmatpush.xpose.msra.mxu0 0.0
    %633 = vmatpush.xpose.msra.mxu0 0.0
    %634 = vmatpush.xpose.msra.mxu0 0.0
    %635 = vmatpush.xpose.msra.mxu0 0.0
    %636 = vmatpush.xpose.msra.mxu0 %v619
    %637 = vmatmul.f32.gmra.mxu0 %v617
    %v638 = vpop.f32.mrf.mxu0
    %v639 = vadd.f32 0.0, %v638
    %640 = vdwg.mxu0
    %v641 = vmul.f32 %v639, 0.35355338
    %v642 = vsel %vm126, %v641, -inf
    %643 = vmax.xlane.f32.xlu0 %v642
    %v644 = vpop.xlane.xlu0 %643
    %v645 = vsub.f32 %v641, %v644
    %v646 = vmul.f32 %v645, 1.442695
    %v647 = vpow.pop %v646
    %v648 = vsel %vm126, %v647, 0.0
    %649 = vadd.xlane.f32.xlu0 %v648
    %v650 = vpop.xlane.xlu0 %649
    %v651 = vrcp.pop %v650
    %v652 = vmul.f32 %v650, %v651
    %v653 = vsub.f32 1.0, %v652
    %v654 = vmul.f32 %v651, %v653
    %v655 = vadd.f32 %v651, %v654
    %vm656 = vweird.f32 %v650
    %vm657 = vweird.f32 %v651
    %vm658 = vmor %vm656, %vm657
    %v659 = vsel %vm658, %v651, %v655
    %v660 = vand.u32 2147483647, %v650
    %vm661 = vcmp.eq.f32.partialorder %v660, 8.507059e+37
    %v662 = vand.u32 %v650, 2147483648
    %v663 = vor.u32 1.1754944e-38, %v662
    %v664 = vsel %vm661, %v663, %v659
    %v665 = vmul.f32 %v647, %v664
    %666 = vrot.lane.b32.xlu0 %v122, 48
    %v667 = vpop.permute.xlu0 %666
    %v670 = vsel %vm126, %v665, 0
    %672 = vmatpush.msra.mxu0 0.0
    %673 = vmatpush.msra.mxu0 0.0
    %674 = vmatpush.msra.mxu0 0.0
    %675 = vmatpush.msra.mxu0 0.0
    %676 = vmatpush.msra.mxu0 0.0
    %677 = vmatpush.msra.mxu0 0.0
    %678 = vmatpush.msra.mxu0 0.0
    %679 = vmatpush.msra.mxu0 0.0
    %680 = vmatpush.msra.mxu0 0.0
    %681 = vmatpush.msra.mxu0 0.0
    %682 = vmatpush.msra.mxu0 0.0
    %683 = vmatpush.msra.mxu0 0.0
    %684 = vmatpush.msra.mxu0 0.0
    %685 = vmatpush.msra.mxu0 0.0
    %686 = vmatpush.msra.mxu0 0.0
    %687 = vmatpush.msra.mxu0 %v667
    %688 = vmatmul.f32.gmra.mxu0 %v670
    %v689 = vpop.f32.mrf.mxu0
    %v690 = vadd.f32 0.0, %v689
    %691 = vdwg.mxu0
    %692 = vrot.lane.b32.xlu0 %v122, 104
    %v693 = vpop.permute.xlu0 %692
    %694 = vrot.lane.b32.xlu0 %v122, 72
    %v695 = vpop.permute.xlu0 %694
    %v696 = vsel %vm126, %v693, 0
    %v698 = vsel %vm126, %v695, 0
    %700 = vmatpush.xpose.msra.mxu0 0.0
    %701 = vmatpush.xpose.msra.mxu0 0.0
    %702 = vmatpush.xpose.msra.mxu0 0.0
    %703 = vmatpush.xpose.msra.mxu0 0.0
    %704 = vmatpush.xpose.msra.mxu0 0.0
    %705 = vmatpush.xpose.msra.mxu0 0.0
    %706 = vmatpush.xpose.msra.mxu0 0.0
    %707 = vmatpush.xpose.msra.mxu0 0.0
    %708 = vmatpush.xpose.msra.mxu0 0.0
    %709 = vmatpush.xpose.msra.mxu0 0.0
    %710 = vmatpush.xpose.msra.mxu0 0.0
    %711 = vmatpush.xpose.msra.mxu0 0.0
    %712 = vmatpush.xpose.msra.mxu0 0.0
    %713 = vmatpush.xpose.msra.mxu0 0.0
    %714 = vmatpush.xpose.msra.mxu0 0.0
    %715 = vmatpush.xpose.msra.mxu0 %v698
    %716 = vmatmul.f32.gmra.mxu0 %v696
    %v717 = vpop.f32.mrf.mxu0
    %v718 = vadd.f32 0.0, %v717
    %719 = vdwg.mxu0
    %v720 = vmul.f32 %v718, 0.35355338
    %v721 = vsel %vm126, %v720, -inf
    %722 = vmax.xlane.f32.xlu0 %v721
    %v723 = vpop.xlane.xlu0 %722
    %v724 = vsub.f32 %v720, %v723
    %v725 = vmul.f32 %v724, 1.442695
    %v726 = vpow.pop %v725
    %v727 = vsel %vm126, %v726, 0.0
    %728 = vadd.xlane.f32.xlu0 %v727
    %v729 = vpop.xlane.xlu0 %728
    %v730 = vrcp.pop %v729
    %v731 = vmul.f32 %v729, %v730
    %v732 = vsub.f32 1.0, %v731
    %v733 = vmul.f32 %v730, %v732
    %v734 = vadd.f32 %v730, %v733
    %vm735 = vweird.f32 %v729
    %vm736 = vweird.f32 %v730
    %vm737 = vmor %vm735, %vm736
    %v738 = vsel %vm737, %v730, %v734
    %v739 = vand.u32 2147483647, %v729
    %vm740 = vcmp.eq.f32.partialorder %v739, 8.507059e+37
    %v741 = vand.u32 %v729, 2147483648
    %v742 = vor.u32 1.1754944e-38, %v741
    %v743 = vsel %vm740, %v742, %v738
    %v744 = vmul.f32 %v726, %v743
    %745 = vrot.lane.b32.xlu0 %v122, 40
    %v746 = vpop.permute.xlu0 %745
    %v749 = vsel %vm126, %v744, 0
    %751 = vmatpush.msra.mxu0 0.0
    %752 = vmatpush.msra.mxu0 0.0
    %753 = vmatpush.msra.mxu0 0.0
    %754 = vmatpush.msra.mxu0 0.0
    %755 = vmatpush.msra.mxu0 0.0
    %756 = vmatpush.msra.mxu0 0.0
    %757 = vmatpush.msra.mxu0 0.0
    %758 = vmatpush.msra.mxu0 0.0
    %759 = vmatpush.msra.mxu0 0.0
    %760 = vmatpush.msra.mxu0 0.0
    %761 = vmatpush.msra.mxu0 0.0
    %762 = vmatpush.msra.mxu0 0.0
    %763 = vmatpush.msra.mxu0 0.0
    %764 = vmatpush.msra.mxu0 0.0
    %765 = vmatpush.msra.mxu0 0.0
    %766 = vmatpush.msra.mxu0 %v746
    %767 = vmatmul.f32.gmra.mxu0 %v749
    %v768 = vpop.f32.mrf.mxu0
    %v769 = vadd.f32 0.0, %v768
    %770 = vdwg.mxu0
    %772 = vrot.lane.b32.xlu0 %v611, 8
    %v773 = vpop.permute.xlu0 %772
    %776 = vrot.lane.b32.xlu0 %v690, 16
    %v777 = vpop.permute.xlu0 %776
    %780 = vrot.lane.b32.xlu0 %v769, 24
    %v781 = vpop.permute.xlu0 %780
    %v783 = vsel %vm126, %v532, %v773
    %v784 = vsel %vm452, %v783, %v777
    %v785 = vsel %vm454, %v784, %v781
    %v786 = vld [vmem:[#allocation7] sm:$0xff]
    %v787 = vld [vmem:[#allocation7 + $0x8] sm:$0xff]
    %v788 = vld [vmem:[#allocation7 + $0x10] sm:$0xff]
    %v789 = vld [vmem:[#allocation7 + $0x18] sm:$0xff]
    %v790 = vld [vmem:[%s3] sm:$0x1]
    %v792 = vperm.slane %v790, 0
    %v795 = vsel %vm71, %v455, 0
    %v798 = vsel %vm71, %v785, 0
    %800 = vmatpush.msra.mxu0 0.0
    %801 = vmatpush.msra.mxu0 0.0
    %802 = vmatpush.msra.mxu0 0.0
    %803 = vmatpush.msra.mxu0 0.0
    %804 = vmatpush.msra.mxu0 0.0
    %805 = vmatpush.msra.mxu0 0.0
    %806 = vmatpush.msra.mxu0 0.0
    %807 = vmatpush.msra.mxu0 0.0
    %808 = vmatpush.msra.mxu0 0.0
    %809 = vmatpush.msra.mxu0 0.0
    %810 = vmatpush.msra.mxu0 0.0
    %811 = vmatpush.msra.mxu0 0.0
    %812 = vmatpush.msra.mxu0 %v789
    %813 = vmatpush.msra.mxu0 %v788
    %814 = vmatpush.msra.mxu0 %v787
    %815 = vmatpush.msra.mxu0 %v786
    %816 = vmatmul.f32.gmra.mxu0 %v795
    %v817 = vpop.f32.mrf.mxu0
    %v818 = vadd.f32 %v792, %v817
    %819 = vmatmul.f32.gmra.mxu0 %v798
    %v820 = vpop.f32.mrf.mxu0
    %v821 = vadd.f32 %v792, %v820
    %822 = vdwg.mxu0
    %823 = vst.msk [vmem:[#allocation8] sm:$0xff] %vm71, %v818
    %824 = vst.msk [vmem:[#allocation8 + $0x8] sm:$0xff] %vm71, %v821
    // Predicated region
    $region30: #{spike_self_attention.1} parent=1 // pred_check
      _
    $region31: #{spike_self_attention.1} parent=1 // pred_check_branch
      %826 = sbr.rel (0) target = $region33
    $region32: #{spike_self_attention.1} parent=1 // pred_region
      %828 = vsyncadd [#allocation4], 0
      %s829 = sshll.u32 [#allocation8], 4
      %s830 = int_to_ptr.vmem [resolvable:$true] %s829
      %s831 = sshll.u32 %s4, 4
      %s832 = int_to_ptr.hbm [resolvable:$true] %s831
      %837 = dma.vmem_to_hbm [thread:$0]  %s830, 256, %s832, [#allocation4], 128, 128, 8
    $region33: #{spike_self_attention.1} parent=1 // pred_fallthru
      _
    // Predicated region
    $region34: #{spike_self_attention.1} parent=1 // pred_check
      _
    $region35: #{spike_self_attention.1} parent=1 // pred_check_branch
      %839 = sbr.rel (0) target = $region37
    $region36: #{spike_self_attention.1} parent=1 // pred_region
      %841 = dma.done [#allocation4], 256
    $region37: #{spike_self_attention.1} parent=1 // pred_fallthru
      _
    %842 = vsyncpa [#allocation3], 1
    %843 = vsyncpa [#allocation6], 1
    %844 = vsyncpa [#allocation4], 1

</llo_original>
